<compile_context>
chip_gen: v7x
topology: tpu7x:2x2x1
jax: 0.10.0
libtpu: 0.0.40
codegen_flags: <defaults>
</compile_context>

<pallas_src>
import functools

import jax
import jax.numpy as jnp
from jax import lax
from jax.experimental import pallas as pl
from jax.experimental.pallas import tpu as pltpu

LN_EPS = 1e-5  # torch.nn.LayerNorm default
_INV_SQRT2 = 0.7071067811865476


def _gelu_exact(x):
    # torch.nn.GELU() default = exact erf formulation.
    return 0.5 * x * (1.0 + lax.erf(x * jnp.asarray(_INV_SQRT2, x.dtype)))


def _round_up(x, m):
    return (x + m - 1) // m * m


@functools.lru_cache(maxsize=None)
def _chip_info():
    """Returns (vmem_cap_bytes, use_bf16_gelu, two_tensorcores, prefer_256_pad)."""
    kind = ""
    try:
        kind = jax.devices()[0].device_kind.lower()
    except Exception:
        pass
    is_v7 = ("v7" in kind) or ("tpu7" in kind)
    is_v6 = "v6" in kind
    vmem_physical = None
    try:
        vmem_physical = int(pltpu.get_tpu_info().vmem_capacity_bytes)
    except Exception:
        vmem_physical = None
    if vmem_physical is None:
        vmem_physical = (64 << 20) if is_v7 else (128 << 20)
    if vmem_physical <= (80 << 20):          # v7x-class: 64 MiB per TensorCore
        cap = vmem_physical - (12 << 20)     # leave compiler-scratch headroom
    else:                                    # v5e / v6e: 128 MiB
        cap = min(vmem_physical - (20 << 20), 110 << 20)
    cap = max(cap, 32 << 20)
    use_bf16_gelu = is_v6 or is_v7           # v5e has no bf16 VALU
    return cap, use_bf16_gelu, is_v7, (is_v6 or is_v7)


@functools.lru_cache(maxsize=None)
def _single_buffer_supported():
    """One-time cached build-time probe: does this runtime accept pl.Buffered(1)?"""
    if not hasattr(pl, "Buffered"):
        return False
    try:
        def k(a_ref, o_ref):
            o_ref[...] = a_ref[...] + 1.0

        fn = pl.pallas_call(
            k,
            out_shape=jax.ShapeDtypeStruct((8, 128), jnp.float32),
            grid=(1,),
            in_specs=[pl.BlockSpec((8, 128), lambda i: (0, 0),
                                   pipeline_mode=pl.Buffered(1))],
            out_specs=pl.BlockSpec((8, 128), lambda i: (0, 0)),
        )
        jax.jit(fn).lower(
            jax.ShapeDtypeStruct((8, 128), jnp.float32)).compile()
        return True
    except Exception:
        return False


def feedforward_kernel(x_ref, gamma_ref, beta_ref, w1_ref, b1_ref,
                       w2_ref, b2_ref, out_ref, acc_ref, *,
                       dim_real, hid_chunk, compute_dtype, gelu_dtype):
    x = x_ref[...].astype(jnp.float32)            # (tm, dim_p)
    dim_pad = x.shape[-1]
    inv_d = 1.0 / dim_real

    # ---- LayerNorm over the *real* feature width.  Padded columns hold zeros
    # and are masked out of the statistics, so feature padding is neutral.
    if dim_pad == dim_real:
        mean = jnp.mean(x, axis=-1, keepdims=True)
        xc = x - mean
    else:
        mean = jnp.sum(x, axis=-1, keepdims=True) * inv_d
        col = lax.broadcasted_iota(jnp.int32, (1, dim_pad), 1)
        xc = jnp.where(col < dim_real, x - mean, 0.0)
    var = jnp.sum(xc * xc, axis=-1, keepdims=True) * inv_d
    xn = xc * lax.rsqrt(var + LN_EPS) * gamma_ref[...] + beta_ref[...]
    xn_c = xn.astype(compute_dtype)               # bf16 MXU operand

    hid_pad = w1_ref.shape[1]
    n_chunks = hid_pad // hid_chunk

    acc_ref[...] = jnp.zeros_like(acc_ref)

    # ---- Hidden axis chunked: matmul1-chunk -> bias+GELU-chunk -> matmul2
    # accumulate.  GELU of chunk i overlaps the MXU working on neighbours and
    # the live (tm, hid) slab is only (tm, hid_chunk).  Dropout(0) = identity.
    def chunk_step(c):
        off = c * hid_chunk
        if not isinstance(off, int):
            off = pl.multiple_of(off, hid_chunk)
        h = jnp.dot(xn_c, w1_ref[:, pl.ds(off, hid_chunk)],
                    preferred_element_type=jnp.float32)
        b1c = b1_ref[:, pl.ds(off, hid_chunk)].astype(gelu_dtype)
        h = _gelu_exact(h.astype(gelu_dtype) + b1c)   # bf16 on v6e/v7x, f32 on v5e
        acc_ref[...] += jnp.dot(h.astype(compute_dtype),
                                w2_ref[pl.ds(off, hid_chunk), :],
                                preferred_element_type=jnp.float32)

    if n_chunks <= 8:
        for c in range(n_chunks):        # static slices, fully unrolled
            chunk_step(c)
    else:
        def body(c, carry):
            chunk_step(c)
            return carry
        lax.fori_loop(0, n_chunks, body, 0)

    out_ref[...] = (acc_ref[...] + b2_ref[...]).astype(out_ref.dtype)


def feedforward(x, params, *, tm=512, compute_dtype=jnp.bfloat16):
    """x: (B, N, dim) float32.  params: dict from init_params."""
    B, N, dim = x.shape
    hidden = params["w1"].shape[1]
    M = B * N

    vmem_cap, use_bf16_gelu, two_cores, prefer_256 = _chip_info()
    gelu_dtype = jnp.bfloat16 if use_bf16_gelu else jnp.float32
    single_buffer = _single_buffer_supported()
    wbuf = 1 if single_buffer else 2

    # Padded geometry: lane-aligned features (prefer 256 on v6e/v7x for the
    # 256-wide MXU when dims are large), 8-aligned row tile.
    def lane_pad(n):
        p = _round_up(n, 128)
        if prefer_256 and p > 256 and p % 256:
            p = _round_up(n, 256)
        return p

    dim_p = lane_pad(dim)
    hid_p = lane_pad(hidden)

    # Hidden chunk: largest multiple of 128 that divides hid_p, capped at 512.
    hid_chunk = 128
    for c in range(min(512, hid_p), 127, -128):
        if hid_p % c == 0:
            hid_chunk = c
            break

    itemsize_c = jnp.dtype(compute_dtype).itemsize
    gdt = jnp.dtype(gelu_dtype).itemsize
    w_bytes = wbuf * 2 * dim_p * hid_p * itemsize_c           # w1 + w2
    small_bytes = wbuf * 4 * (3 * dim_p + hid_p)              # gamma,beta,b1,b2

    def need_bytes(tm_):
        io = 2 * 2 * tm_ * dim_p * 4                          # x/out tiles, 2-buf
        acc = tm_ * dim_p * 4                                 # scratch accumulator
        ln = tm_ * dim_p * (3 * 4 + itemsize_c) + tm_ * dim_p * 4  # LN temps + partial
        chunk = tm_ * hid_chunk * (4 + gdt + itemsize_c)      # h slabs per chunk
        return int((w_bytes + small_bytes + io + acc + ln + chunk) * 1.25)

    tm_eff = min(_round_up(max(int(tm), 8), 8), _round_up(M, 8))
    # v7x has two TensorCores: make sure the "parallel" grid has >= 2 steps.
    if two_cores and _round_up(M, tm_eff) // tm_eff < 2 and M > 8:
        tm_eff = _round_up((M + 1) // 2, 8)
    # Shrink the row tile until the footprint fits the per-generation budget.
    while tm_eff > 8 and need_bytes(tm_eff) > vmem_cap:
        tm_eff = max(8, _round_up(tm_eff // 2, 8))
    # TODO(synk): if w_bytes alone exceeds vmem_cap (very large ViT on v7x),
    # stream w1/w2 tiles from HBM (memory_space=pl.ANY + emit_pipeline) instead
    # of holding them resident.

    M_p = _round_up(M, tm_eff)
    grid = (M_p // tm_eff,)

    x2 = x.reshape(M, dim)
    if (M_p, dim_p) != (M, dim):
        x2 = jnp.pad(x2, ((0, M_p - M), (0, dim_p - dim)))

    # Parameters: pad + cast ONCE here (no per-grid-step casts inside kernel).
    w1 = jnp.pad(params["w1"],
                 ((0, dim_p - dim), (0, hid_p - hidden))).astype(compute_dtype)
    w2 = jnp.pad(params["w2"],
                 ((0, hid_p - hidden), (0, dim_p - dim))).astype(compute_dtype)
    gamma = jnp.pad(params["gamma"].astype(jnp.float32),
                    (0, dim_p - dim)).reshape(1, dim_p)
    beta = jnp.pad(params["beta"].astype(jnp.float32),
                   (0, dim_p - dim)).reshape(1, dim_p)
    b1 = jnp.pad(params["b1"].astype(jnp.float32),
                 (0, hid_p - hidden)).reshape(1, hid_p)
    b2 = jnp.pad(params["b2"].astype(jnp.float32),
                 (0, dim_p - dim)).reshape(1, dim_p)

    vmem_limit = int(min(vmem_cap, max(need_bytes(tm_eff), 32 << 20)))

    cost = pl.CostEstimate(
        flops=4 * M_p * dim_p * hid_p,            # two matmuls
        transcendentals=M_p * hid_p,              # erf
        bytes_accessed=(x2.size + M_p * dim_p) * x.dtype.itemsize
        + w1.size * w1.dtype.itemsize + w2.size * w2.dtype.itemsize,
    )

    kernel = functools.partial(feedforward_kernel, dim_real=dim,
                               hid_chunk=hid_chunk,
                               compute_dtype=compute_dtype,
                               gelu_dtype=gelu_dtype)

    def const_spec(shape):
        if single_buffer:
            return pl.BlockSpec(shape, lambda i: (0, 0),
                                pipeline_mode=pl.Buffered(1))
        return pl.BlockSpec(shape, lambda i: (0, 0))

    out = pl.pallas_call(
        kernel,
        out_shape=jax.ShapeDtypeStruct((M_p, dim_p), x.dtype),
        grid_spec=pltpu.PrefetchScalarGridSpec(
            num_scalar_prefetch=0,
            grid=grid,
            in_specs=[
                pl.BlockSpec((tm_eff, dim_p), lambda i: (i, 0)),  # x rows
                const_spec((1, dim_p)),                           # gamma
                const_spec((1, dim_p)),                           # beta
                const_spec((dim_p, hid_p)),                       # w1
                const_spec((1, hid_p)),                           # b1
                const_spec((hid_p, dim_p)),                       # w2
                const_spec((1, dim_p)),                           # b2
            ],
            out_specs=pl.BlockSpec((tm_eff, dim_p), lambda i: (i, 0)),
            scratch_shapes=[pltpu.VMEM((tm_eff, dim_p), jnp.float32)],
        ),
        compiler_params=pltpu.CompilerParams(
            dimension_semantics=("parallel",),
            vmem_limit_bytes=vmem_limit),
        cost_estimate=cost,
    )(x2, gamma, beta, w1, b1, w2, b2)

    return out[:M, :dim].reshape(B, N, dim)


def init_params(key, dim, hidden_dim):
    """Deterministic init matching the module's parameter shapes.

    nn.Linear stores weight as (out, in); we keep the transposed (in, out)
    layout so the kernel does x @ W directly.
    """
    k1, k2, k3, k4 = jax.random.split(key, 4)
    bound1 = 1.0 / jnp.sqrt(dim)
    bound2 = 1.0 / jnp.sqrt(hidden_dim)
    return {
        "gamma": jnp.ones((dim,), jnp.float32),
        "beta": jnp.zeros((dim,), jnp.float32),
        "w1": jax.random.uniform(k1, (dim, hidden_dim), jnp.float32,
                                 -bound1, bound1),
        "b1": jax.random.uniform(k2, (hidden_dim,), jnp.float32,
                                 -bound1, bound1),
        "w2": jax.random.uniform(k3, (hidden_dim, dim), jnp.float32,
                                 -bound2, bound2),
        "b2": jax.random.uniform(k4, (dim,), jnp.float32,
                                 -bound2, bound2),
    }


def feedforward_ref(x, params, *, compute_dtype=jnp.bfloat16,
                    gelu_dtype=jnp.float32):
    """Pure-JAX reference mirroring the kernel's bf16-into-MXU convention.

    NOTE: intentionally matches the kernel's mixed-precision convention
    (bf16 MXU operands, f32 accumulation, GELU in gelu_dtype), not a strict
    f32 torch Linear.
    """
    mean = jnp.mean(x, axis=-1, keepdims=True)
    var = jnp.mean((x - mean) ** 2, axis=-1, keepdims=True)
    xn = (x - mean) * lax.rsqrt(var + LN_EPS) * params["gamma"] + params["beta"]
    w1 = params["w1"].astype(compute_dtype)
    w2 = params["w2"].astype(compute_dtype)
    h = jnp.dot(xn.astype(compute_dtype), w1, preferred_element_type=jnp.float32)
    h = _gelu_exact(h.astype(gelu_dtype) + params["b1"].astype(gelu_dtype))
    y = jnp.dot(h.astype(compute_dtype), w2,
                preferred_element_type=jnp.float32) + params["b2"]
    return y


if __name__ == "__main__":
    B, N, dim, hidden_dim = 2, 8, 32, 64
    key = jax.random.PRNGKey(0)
    kx, kp = jax.random.split(key)
    x = jax.random.normal(kx, (B, N, dim), jnp.float32)
    params = init_params(kp, dim, hidden_dim)

    y = feedforward(x, params)
    jax.block_until_ready(y)

    _, use_bf16_gelu, _, _ = _chip_info()
    gelu_dtype = jnp.bfloat16 if use_bf16_gelu else jnp.float32
    y_ref = feedforward_ref(x, params, gelu_dtype=gelu_dtype)

    tol = 1e-2 if use_bf16_gelu else 5e-3
    max_err = float(jnp.max(jnp.abs(y - y_ref)))
    assert jnp.allclose(y, y_ref, atol=tol, rtol=tol), max_err

    print("KERNEL_OK")
</pallas_src>

<mosaic_0001>
module attributes {stable_mosaic.version = 11 : i64} {
  func.func @feedforward_kernel(%arg0: i32, %arg1: memref<16x128xf32, #tpu.memory_space<vmem>>, %arg2: memref<1x128xf32, #tpu.memory_space<vmem>>, %arg3: memref<1x128xf32, #tpu.memory_space<vmem>>, %arg4: memref<128x128xbf16, #tpu.memory_space<vmem>>, %arg5: memref<1x128xf32, #tpu.memory_space<vmem>>, %arg6: memref<128x128xbf16, #tpu.memory_space<vmem>>, %arg7: memref<1x128xf32, #tpu.memory_space<vmem>>, %arg8: memref<16x128xf32, #tpu.memory_space<vmem>>, %arg9: memref<16x128xf32, #tpu.memory_space<vmem>>) attributes {dimension_semantics = [#tpu.dimension_semantics<parallel>], iteration_bounds = array<i64: 1>, scalar_prefetch = 0 : i64, scratch_operands = 1 : i64, tpu.core_type = #tpu.core_type<tc>, window_params = [{transform_indices = @transform_0, window_bounds = array<i64: 16, 128>}, {pipeline_mode = #tpu.pipeline_mode<synchronous>, transform_indices = @transform_1, window_bounds = array<i64: 1, 128>}, {pipeline_mode = #tpu.pipeline_mode<synchronous>, transform_indices = @transform_2, window_bounds = array<i64: 1, 128>}, {pipeline_mode = #tpu.pipeline_mode<synchronous>, transform_indices = @transform_3, window_bounds = array<i64: 128, 128>}, {pipeline_mode = #tpu.pipeline_mode<synchronous>, transform_indices = @transform_4, window_bounds = array<i64: 1, 128>}, {pipeline_mode = #tpu.pipeline_mode<synchronous>, transform_indices = @transform_5, window_bounds = array<i64: 128, 128>}, {pipeline_mode = #tpu.pipeline_mode<synchronous>, transform_indices = @transform_6, window_bounds = array<i64: 1, 128>}, {transform_indices = @transform_7, window_bounds = array<i64: 16, 128>}]} {
    %c0 = arith.constant 0 : index
    %c0_0 = arith.constant 0 : index
    %0 = vector.load %arg1[%c0, %c0_0] : memref<16x128xf32, #tpu.memory_space<vmem>>, vector<16x128xf32>
    %cst = arith.constant dense<0.000000e+00> : vector<16xf32>
    %1 = vector.multi_reduction <add>, %0, %cst [1] : vector<16x128xf32> to vector<16xf32>
    %2 = vector.shape_cast %1 : vector<16xf32> to vector<16x1xf32>
    %cst_1 = arith.constant 3.125000e-02 : f32
    %3 = vector.broadcast %cst_1 : f32 to vector<16x1xf32>
    %4 = arith.mulf %2, %3 : vector<16x1xf32>
    %5 = tpu.iota {dimensions = array<i32: 1>} : vector<1x128xi32>
    %c32_i32 = arith.constant 32 : i32
    %6 = vector.broadcast %c32_i32 : i32 to vector<1x128xi32>
    %7 = arith.cmpi slt, %5, %6 : vector<1x128xi32>
    %8 = vector.broadcast %4 : vector<16x1xf32> to vector<16x128xf32>
    %9 = arith.subf %0, %8 : vector<16x128xf32>
    %cst_2 = arith.constant 0.000000e+00 : f32
    %10 = vector.shape_cast %7 : vector<1x128xi1> to vector<1x128xi1>
    %11 = vector.broadcast %10 : vector<1x128xi1> to vector<16x128xi1>
    %12 = vector.broadcast %cst_2 : f32 to vector<16x128xf32>
    %13 = arith.select %11, %9, %12 : vector<16x128xi1>, vector<16x128xf32>
    %14 = arith.mulf %13, %13 : vector<16x128xf32>
    %cst_3 = arith.constant dense<0.000000e+00> : vector<16xf32>
    %15 = vector.multi_reduction <add>, %14, %cst_3 [1] : vector<16x128xf32> to vector<16xf32>
    %16 = vector.shape_cast %15 : vector<16xf32> to vector<16x1xf32>
    %cst_4 = arith.constant 3.125000e-02 : f32
    %17 = vector.broadcast %cst_4 : f32 to vector<16x1xf32>
    %18 = arith.mulf %16, %17 : vector<16x1xf32>
    %cst_5 = arith.constant 9.99999974E-6 : f32
    %19 = vector.broadcast %cst_5 : f32 to vector<16x1xf32>
    %20 = arith.addf %18, %19 : vector<16x1xf32>
    %21 = math.rsqrt %20 : vector<16x1xf32>
    %22 = vector.broadcast %21 : vector<16x1xf32> to vector<16x128xf32>
    %23 = arith.mulf %13, %22 : vector<16x128xf32>
    %c0_6 = arith.constant 0 : index
    %c0_7 = arith.constant 0 : index
    %24 = vector.load %arg2[%c0_6, %c0_7] : memref<1x128xf32, #tpu.memory_space<vmem>>, vector<1x128xf32>
    %25 = vector.broadcast %24 : vector<1x128xf32> to vector<16x128xf32>
    %26 = arith.mulf %23, %25 : vector<16x128xf32>
    %c0_8 = arith.constant 0 : index
    %c0_9 = arith.constant 0 : index
    %27 = vector.load %arg3[%c0_8, %c0_9] : memref<1x128xf32, #tpu.memory_space<vmem>>, vector<1x128xf32>
    %28 = vector.broadcast %27 : vector<1x128xf32> to vector<16x128xf32>
    %29 = arith.addf %26, %28 : vector<16x128xf32>
    %30 = arith.truncf %29 : vector<16x128xf32> to vector<16x128xbf16>
    %cst_10 = arith.constant 0.000000e+00 : f32
    %31 = vector.broadcast %cst_10 : f32 to vector<16x128xf32>
    %c0_11 = arith.constant 0 : index
    %c0_12 = arith.constant 0 : index
    %32 = vector.load %arg9[%c0_11, %c0_12] : memref<16x128xf32, #tpu.memory_space<vmem>>, vector<16x128xf32>
    tpu.vector_store %arg9[%c0_11, %c0_12], %31 {strides = array<i32>} : memref<16x128xf32, #tpu.memory_space<vmem>>, vector<16x128xf32>,
    %c0_13 = arith.constant 0 : index
    %c0_14 = arith.constant 0 : index
    %33 = vector.load %arg4[%c0_13, %c0_14] : memref<128x128xbf16, #tpu.memory_space<vmem>>, vector<128x128xbf16>
    %cst_15 = arith.constant dense<0.000000e+00> : vector<16x128xf32>
    %34 = tpu.matmul %30, %33, %cst_15 {dimension_numbers = #tpu.dot_dimension_numbers<[1], [0], [0], [1], [0, 0, 1, 1], [], []>} : vector<16x128xbf16>, vector<128x128xbf16>, vector<16x128xf32> -> vector<16x128xf32>
    %c0_16 = arith.constant 0 : index
    %c0_17 = arith.constant 0 : index
    %35 = vector.load %arg5[%c0_16, %c0_17] : memref<1x128xf32, #tpu.memory_space<vmem>>, vector<1x128xf32>
    %36 = vector.broadcast %35 : vector<1x128xf32> to vector<16x128xf32>
    %37 = arith.addf %34, %36 : vector<16x128xf32>
    %cst_18 = arith.constant 5.000000e-01 : f32
    %38 = vector.broadcast %cst_18 : f32 to vector<16x128xf32>
    %39 = arith.mulf %38, %37 : vector<16x128xf32>
    %cst_19 = arith.constant 0.707106769 : f32
    %40 = vector.broadcast %cst_19 : f32 to vector<16x128xf32>
    %41 = arith.mulf %37, %40 : vector<16x128xf32>
    %42 = math.erf %41 : vector<16x128xf32>
    %cst_20 = arith.constant 1.000000e+00 : f32
    %43 = vector.broadcast %cst_20 : f32 to vector<16x128xf32>
    %44 = arith.addf %43, %42 : vector<16x128xf32>
    %45 = arith.mulf %39, %44 : vector<16x128xf32>
    %c0_21 = arith.constant 0 : index
    %c0_22 = arith.constant 0 : index
    %46 = vector.load %arg9[%c0_21, %c0_22] : memref<16x128xf32, #tpu.memory_space<vmem>>, vector<16x128xf32>
    %47 = arith.truncf %45 : vector<16x128xf32> to vector<16x128xbf16>
    %c0_23 = arith.constant 0 : index
    %c0_24 = arith.constant 0 : index
    %48 = vector.load %arg6[%c0_23, %c0_24] : memref<128x128xbf16, #tpu.memory_space<vmem>>, vector<128x128xbf16>
    %cst_25 = arith.constant dense<0.000000e+00> : vector<16x128xf32>
    %49 = tpu.matmul %47, %48, %cst_25 {dimension_numbers = #tpu.dot_dimension_numbers<[1], [0], [0], [1], [0, 0, 1, 1], [], []>} : vector<16x128xbf16>, vector<128x128xbf16>, vector<16x128xf32> -> vector<16x128xf32>
    %50 = arith.addf %46, %49 : vector<16x128xf32>
    %c0_26 = arith.constant 0 : index
    %c0_27 = arith.constant 0 : index
    %51 = vector.load %arg9[%c0_26, %c0_27] : memref<16x128xf32, #tpu.memory_space<vmem>>, vector<16x128xf32>
    tpu.vector_store %arg9[%c0_26, %c0_27], %50 {strides = array<i32>} : memref<16x128xf32, #tpu.memory_space<vmem>>, vector<16x128xf32>,
    %c0_28 = arith.constant 0 : index
    %c0_29 = arith.constant 0 : index
    %52 = vector.load %arg9[%c0_28, %c0_29] : memref<16x128xf32, #tpu.memory_space<vmem>>, vector<16x128xf32>
    %c0_30 = arith.constant 0 : index
    %c0_31 = arith.constant 0 : index
    %53 = vector.load %arg7[%c0_30, %c0_31] : memref<1x128xf32, #tpu.memory_space<vmem>>, vector<1x128xf32>
    %54 = vector.broadcast %53 : vector<1x128xf32> to vector<16x128xf32>
    %55 = arith.addf %52, %54 : vector<16x128xf32>
    %c0_32 = arith.constant 0 : index
    %c0_33 = arith.constant 0 : index
    %56 = vector.load %arg8[%c0_32, %c0_33] : memref<16x128xf32, #tpu.memory_space<vmem>>, vector<16x128xf32>
    tpu.vector_store %arg8[%c0_32, %c0_33], %55 {strides = array<i32>} : memref<16x128xf32, #tpu.memory_space<vmem>>, vector<16x128xf32>,
    return
  }
  func.func @transform_0(%arg0: i32) -> (i32, i32) {
    %c0_i32 = arith.constant 0 : i32
    %c0_i32_0 = arith.constant 0 : i32
    return %arg0, %c0_i32 : i32, i32
  }
  func.func @transform_1(%arg0: i32) -> (i32, i32) {
    %c0_i32 = arith.constant 0 : i32
    %c0_i32_0 = arith.constant 0 : i32
    %c0_i32_1 = arith.constant 0 : i32
    return %c0_i32, %c0_i32_0 : i32, i32
  }
  func.func @transform_2(%arg0: i32) -> (i32, i32) {
    %c0_i32 = arith.constant 0 : i32
    %c0_i32_0 = arith.constant 0 : i32
    %c0_i32_1 = arith.constant 0 : i32
    return %c0_i32, %c0_i32_0 : i32, i32
  }
  func.func @transform_3(%arg0: i32) -> (i32, i32) {
    %c0_i32 = arith.constant 0 : i32
    %c0_i32_0 = arith.constant 0 : i32
    %c0_i32_1 = arith.constant 0 : i32
    return %c0_i32, %c0_i32_0 : i32, i32
  }
  func.func @transform_4(%arg0: i32) -> (i32, i32) {
    %c0_i32 = arith.constant 0 : i32
    %c0_i32_0 = arith.constant 0 : i32
    %c0_i32_1 = arith.constant 0 : i32
    return %c0_i32, %c0_i32_0 : i32, i32
  }
  func.func @transform_5(%arg0: i32) -> (i32, i32) {
    %c0_i32 = arith.constant 0 : i32
    %c0_i32_0 = arith.constant 0 : i32
    %c0_i32_1 = arith.constant 0 : i32
    return %c0_i32, %c0_i32_0 : i32, i32
  }
  func.func @transform_6(%arg0: i32) -> (i32, i32) {
    %c0_i32 = arith.constant 0 : i32
    %c0_i32_0 = arith.constant 0 : i32
    %c0_i32_1 = arith.constant 0 : i32
    return %c0_i32, %c0_i32_0 : i32, i32
  }
  func.func @transform_7(%arg0: i32) -> (i32, i32) {
    %c0_i32 = arith.constant 0 : i32
    %c0_i32_0 = arith.constant 0 : i32
    return %arg0, %c0_i32 : i32, i32
  }
}

</mosaic_0001>

<llo_original>
// kernel: tpu_custom_call.1
$region0: #{tpu_custom_call.1}
  #allocation0 [shape = 'u32[]', space=smem, size = 0x4, offset = 0x4, fixed_abs, tag = 'smem constant byte address 0x4 - core index']
  #allocation1 [shape = 'u32[144,128]{1,0:T(1,128)}', space=vmem, size = 0x12000, scoped, tag = 'internal scratch']
  #allocation2 [shape = 'f32[16,128]{1,0:T(8,128)}', space=vmem, size = 0x2000, scoped, tag = 'scratch operand']
  %s0 = inlined_call_operand.hbm [shape: f32[16,128], index: 0, kind: input, shape index: {}]
  %s1 = inlined_call_operand.vmem [shape: f32[1,128], index: 1, kind: input, shape index: {}]
  %s2 = inlined_call_operand.vmem [shape: f32[1,128], index: 2, kind: input, shape index: {}]
  %s3 = inlined_call_operand.hbm [shape: bf16[128,128], index: 3, kind: input, shape index: {}]
  %s4 = inlined_call_operand.vmem [shape: f32[1,128], index: 4, kind: input, shape index: {}]
  %s5 = inlined_call_operand.hbm [shape: bf16[128,128], index: 5, kind: input, shape index: {}]
  %s6 = inlined_call_operand.vmem [shape: f32[1,128], index: 6, kind: input, shape index: {}]
  %s7 = inlined_call_operand.hbm [shape: f32[16,128], index: 7, kind: output, shape index: {}]
  %s8 = sld [smem:[#allocation0]]
  $region50: #{tpu_custom_call.1} parent=0
    _
  %s10 = ssub.s32 1, %s8
  %s11 = scalar_select 0, %s10, %s8
  $region1: #{tpu_custom_call.1} parent=0
    #allocation3 [shape = 'u8[8192]{0}', space=vmem, size = 0x2000, scoped, tag = 'input window, operand 0, single buffered']
    #allocation4 [shape = 's32[1]{0}', space=sflag, size = 0x4, scoped, tag = 'scoped memory for tpu_custom_call.1']
    #allocation5 [shape = 's32[1]{0}', space=sflag, size = 0x4, scoped, tag = 'scoped memory for tpu_custom_call.1']
    #allocation6 [shape = 'u8[32768]{0}', space=vmem, size = 0x8000, scoped, tag = 'input window, operand 3, single buffered']
    #allocation7 [shape = 's32[1]{0}', space=sflag, size = 0x4, scoped, tag = 'scoped memory for tpu_custom_call.1']
    #allocation8 [shape = 'u8[32768]{0}', space=vmem, size = 0x8000, scoped, tag = 'input window, operand 5, single buffered']
    #allocation9 [shape = 'u8[8192]{0}', space=vmem, size = 0x2000, scoped, tag = 'output window, operand 0, single buffered']
    %12 = vsyncpa [#allocation4], 0
    %13 = vsyncpa [#allocation7], 0
    %14 = vsyncpa [#allocation5], 0
    // Predicated region
    $region2: #{tpu_custom_call.1} parent=1 // pred_check
      _
    $region3: #{tpu_custom_call.1} parent=1 // pred_check_branch
      %16 = sbr.rel (0) target = $region5
    $region4: #{tpu_custom_call.1} parent=1 // pred_region
      %s18 = ssub.s32 256, 256
      %19 = vsyncadd [#allocation4], %s18
      %s20 = sshll.u32 [#allocation3], 4
      %s21 = int_to_ptr.vmem [resolvable:$true] %s20
      %26 = dma.hbm_to_vmem [thread:$0]  %s0, 256, %s21, [#allocation4], 128, 128, 8
    $region5: #{tpu_custom_call.1} parent=1 // pred_fallthru
      _
    // Predicated region
    $region6: #{tpu_custom_call.1} parent=1 // pred_check
      _
    $region7: #{tpu_custom_call.1} parent=1 // pred_check_branch
      %28 = sbr.rel (0) target = $region9
    $region8: #{tpu_custom_call.1} parent=1 // pred_region
      _
    $region9: #{tpu_custom_call.1} parent=1 // pred_fallthru
      _
    // Predicated region
    $region10: #{tpu_custom_call.1} parent=1 // pred_check
      _
    $region11: #{tpu_custom_call.1} parent=1 // pred_check_branch
      %30 = sbr.rel (0) target = $region13
    $region12: #{tpu_custom_call.1} parent=1 // pred_region
      _
    $region13: #{tpu_custom_call.1} parent=1 // pred_fallthru
      _
    // Predicated region
    $region14: #{tpu_custom_call.1} parent=1 // pred_check
      _
    $region15: #{tpu_custom_call.1} parent=1 // pred_check_branch
      %32 = sbr.rel (0) target = $region17
    $region16: #{tpu_custom_call.1} parent=1 // pred_region
      %s34 = ssub.s32 1024, 1024
      %35 = vsyncadd [#allocation7], %s34
      %s36 = sshll.u32 [#allocation6], 4
      %s37 = int_to_ptr.vmem [resolvable:$true] %s36
      %42 = dma.hbm_to_vmem [thread:$0]  %s3, 1024, %s37, [#allocation7], 64, 64, 4
    $region17: #{tpu_custom_call.1} parent=1 // pred_fallthru
      _
    // Predicated region
    $region18: #{tpu_custom_call.1} parent=1 // pred_check
      _
    $region19: #{tpu_custom_call.1} parent=1 // pred_check_branch
      %44 = sbr.rel (0) target = $region21
    $region20: #{tpu_custom_call.1} parent=1 // pred_region
      _
    $region21: #{tpu_custom_call.1} parent=1 // pred_fallthru
      _
    // Predicated region
    $region22: #{tpu_custom_call.1} parent=1 // pred_check
      _
    $region23: #{tpu_custom_call.1} parent=1 // pred_check_branch
      %46 = sbr.rel (0) target = $region25
    $region24: #{tpu_custom_call.1} parent=1 // pred_region
      %s48 = ssub.s32 1024, 1024
      %49 = vsyncadd [#allocation7], %s48
      %s50 = sshll.u32 [#allocation8], 4
      %s51 = int_to_ptr.vmem [resolvable:$true] %s50
      %56 = dma.hbm_to_vmem [thread:$0]  %s5, 1024, %s51, [#allocation7], 64, 64, 4
    $region25: #{tpu_custom_call.1} parent=1 // pred_fallthru
      _
    // Predicated region
    $region26: #{tpu_custom_call.1} parent=1 // pred_check
      _
    $region27: #{tpu_custom_call.1} parent=1 // pred_check_branch
      %58 = sbr.rel (0) target = $region29
    $region28: #{tpu_custom_call.1} parent=1 // pred_region
      _
    $region29: #{tpu_custom_call.1} parent=1 // pred_fallthru
      _
    // Predicated region
    $region30: #{tpu_custom_call.1} parent=1 // pred_check
      _
    $region31: #{tpu_custom_call.1} parent=1 // pred_check_branch
      %60 = sbr.rel (0) target = $region33
    $region32: #{tpu_custom_call.1} parent=1 // pred_region
      %61 = dma.done [#allocation4], 256
    $region33: #{tpu_custom_call.1} parent=1 // pred_fallthru
      _
    // Predicated region
    $region34: #{tpu_custom_call.1} parent=1 // pred_check
      _
    $region35: #{tpu_custom_call.1} parent=1 // pred_check_branch
      %63 = sbr.rel (0) target = $region37
    $region36: #{tpu_custom_call.1} parent=1 // pred_region
      %64 = dma.done [#allocation7], 1024
    $region37: #{tpu_custom_call.1} parent=1 // pred_fallthru
      _
    // Predicated region
    $region38: #{tpu_custom_call.1} parent=1 // pred_check
      _
    $region39: #{tpu_custom_call.1} parent=1 // pred_check_branch
      %66 = sbr.rel (0) target = $region41
    $region40: #{tpu_custom_call.1} parent=1 // pred_region
      %67 = dma.done [#allocation7], 1024
    $region41: #{tpu_custom_call.1} parent=1 // pred_fallthru
      _
    %v69 = vld [vmem:[#allocation3] sm:$0xff]
    %v70 = vld [vmem:[#allocation3 + $0x8] sm:$0xff]
    %71 = vadd.xlane.f32.xlu0 %v69
    %v72 = vpop.xlane.xlu0 %71
    %73 = vadd.xlane.f32.xlu0 %v70
    %v74 = vpop.xlane.xlu0 %73
    %v75 = vmul.f32 %v72, 0.03125
    %v76 = vmul.f32 %v74, 0.03125
    %v77 = vlaneseq
    %v78 = vand.u32 %v77, 127
    %vm79 = vcmp.lt.s32.totalorder %v78, 32
    %v80 = vsub.f32 %v69, %v75
    %v81 = vsub.f32 %v70, %v76
    %v82 = vsel %vm79, 1, 0
    %vm83 = vcmp.eq.s32.totalorder %v82, 1
    %v84 = vsel %vm83, %v80, 0.0
    %v85 = vsel %vm83, %v81, 0.0
    %v86 = vmul.f32 %v84, %v84
    %v87 = vmul.f32 %v85, %v85
    %88 = vadd.xlane.f32.xlu0 %v86
    %v89 = vpop.xlane.xlu0 %88
    %90 = vadd.xlane.f32.xlu0 %v87
    %v91 = vpop.xlane.xlu0 %90
    %v92 = vmul.f32 %v89, 0.03125
    %v93 = vmul.f32 %v91, 0.03125
    %v94 = vadd.f32 %v92, 1e-05
    %v95 = vadd.f32 %v93, 1e-05
    %v96 = vrsqrt.pop %v94
    %v97 = vrsqrt.pop %v95
    %v98 = vmul.f32 %v84, %v96
    %v99 = vmul.f32 %v85, %v97
    %v100 = vld [vmem:[%s1] sm:$0x1]
    %v102 = vlaneseq
    %v103 = vshrl.u32 %v102, 7
    %v104 = vsub.s32 0, %v103
    %v105 = vrot.slane %v100, %v104
    %v107 = vmul.f32 %v98, %v105
    %v108 = vmul.f32 %v99, %v105
    %v109 = vld [vmem:[%s2] sm:$0x1]
    %v111 = vlaneseq
    %v112 = vshrl.u32 %v111, 7
    %v113 = vsub.s32 0, %v112
    %v114 = vrot.slane %v109, %v113
    %v116 = vadd.f32 %v107, %v114
    %v117 = vadd.f32 %v108, %v114
    %v118 = vpack.c.bf16 %v117, %v116
    %119 = vst [vmem:[#allocation2] sm:$0xff] 0.0
    %120 = vst [vmem:[#allocation2 + $0x8] sm:$0xff] 0.0
    %v121 = vld [vmem:[#allocation6] sm:$0xf]
    %v122 = vld [vmem:[#allocation6 + $0x4] sm:$0xf]
    %v123 = vld [vmem:[#allocation6 + $0x8] sm:$0xf]
    %v124 = vld [vmem:[#allocation6 + $0xc] sm:$0xf]
    %v125 = vld [vmem:[#allocation6 + $0x10] sm:$0xf]
    %v126 = vld [vmem:[#allocation6 + $0x14] sm:$0xf]
    %v127 = vld [vmem:[#allocation6 + $0x18] sm:$0xf]
    %v128 = vld [vmem:[#allocation6 + $0x1c] sm:$0xf]
    %v129 = vld [vmem:[#allocation6 + $0x20] sm:$0xf]
    %v130 = vld [vmem:[#allocation6 + $0x24] sm:$0xf]
    %v131 = vld [vmem:[#allocation6 + $0x28] sm:$0xf]
    %v132 = vld [vmem:[#allocation6 + $0x2c] sm:$0xf]
    %v133 = vld [vmem:[#allocation6 + $0x30] sm:$0xf]
    %v134 = vld [vmem:[#allocation6 + $0x34] sm:$0xf]
    %v135 = vld [vmem:[#allocation6 + $0x38] sm:$0xf]
    %v136 = vld [vmem:[#allocation6 + $0x3c] sm:$0xf]
    %v137 = vld [vmem:[%s4] sm:$0x1]
    %v139 = vlaneseq
    %v140 = vshrl.u32 %v139, 7
    %v141 = vsub.s32 0, %v140
    %v142 = vrot.slane %v137, %v141
    %v160 = vunpack.c.l.b16 %v121
    %v161 = vunpack.c.l.b16 %v122
    %v162 = vunpack.c.l.b16 %v123
    %v163 = vunpack.c.l.b16 %v124
    %v164 = vunpack.c.l.b16 %v125
    %v165 = vunpack.c.l.b16 %v126
    %v166 = vunpack.c.l.b16 %v127
    %v167 = vunpack.c.l.b16 %v128
    %v168 = vunpack.c.l.b16 %v129
    %v169 = vunpack.c.l.b16 %v130
    %v170 = vunpack.c.l.b16 %v131
    %v171 = vunpack.c.l.b16 %v132
    %v172 = vunpack.c.l.b16 %v133
    %v173 = vunpack.c.l.b16 %v134
    %v174 = vunpack.c.l.b16 %v135
    %v175 = vunpack.c.l.b16 %v136
    %v176 = vpack.c.b16 %v161, %v160
    %v177 = vpack.c.b16 %v163, %v162
    %v178 = vpack.c.b16 %v165, %v164
    %v179 = vpack.c.b16 %v167, %v166
    %v180 = vpack.c.b16 %v169, %v168
    %v181 = vpack.c.b16 %v171, %v170
    %v182 = vpack.c.b16 %v173, %v172
    %v183 = vpack.c.b16 %v175, %v174
    %192 = vmatprep.subr.bf16.mxu0 0
    %193 = vmatpush1.bf16.msra.mxu0 %v176
    %194 = vmatprep.subr.bf16.mxu0 0
    %195 = vmatpush1.bf16.msra.mxu0 %v177
    %196 = vmatprep.subr.bf16.mxu0 0
    %197 = vmatpush1.bf16.msra.mxu0 %v178
    %198 = vmatprep.subr.bf16.mxu0 0
    %199 = vmatpush1.bf16.msra.mxu0 %v179
    %200 = vmatprep.subr.bf16.mxu0 0
    %201 = vmatpush1.bf16.msra.mxu0 %v180
    %202 = vmatprep.subr.bf16.mxu0 0
    %203 = vmatpush1.bf16.msra.mxu0 %v181
    %204 = vmatprep.subr.bf16.mxu0 0
    %205 = vmatpush1.bf16.msra.mxu0 %v182
    %206 = vmatprep.subr.bf16.mxu0 0
    %207 = vmatpush1.bf16.msra.mxu0 %v183
    %208 = vmatprep.subr.bf16.mxu0 0
    %209 = vmatpush1.bf16.msra.mxu0 0
    %210 = vmatprep.subr.bf16.mxu0 0
    %211 = vmatpush1.bf16.msra.mxu0 0
    %212 = vmatprep.subr.bf16.mxu0 0
    %213 = vmatpush1.bf16.msra.mxu0 0
    %214 = vmatprep.subr.bf16.mxu0 0
    %215 = vmatpush1.bf16.msra.mxu0 0
    %216 = vmatprep.subr.bf16.mxu0 0
    %217 = vmatpush1.bf16.msra.mxu0 0
    %218 = vmatprep.subr.bf16.mxu0 0
    %219 = vmatpush1.bf16.msra.mxu0 0
    %220 = vmatprep.subr.bf16.mxu0 0
    %221 = vmatpush1.bf16.msra.mxu0 0
    %222 = vmatprep.subr.bf16.mxu0 0
    %223 = vmatpush1.bf16.msra.mxu0 0
    %224 = vmatprep.mubr.bf16.mxu0 0
    %225 = vmatmul.mubr.bf16.gmra.mrb[0].mxu0 %v118
    %v226 = vpop.f32.mrb[0].mxu0
    %v227 = vadd.f32 %v142, %v226
    %v228 = vpop.f32.mrb[0].mxu0
    %v229 = vpop.f32.mrb[0].mxu0
    %v230 = vadd.f32 %v142, %v229
    %v231 = vpop.f32.mrb[0].mxu0
    %232 = vdwg.mxu0
    %v233 = vmul.f32 %v227, 0.5
    %v234 = vmul.f32 %v230, 0.5
    %v235 = vmul.f32 %v227, 0.70710677
    %v236 = vmul.f32 %v230, 0.70710677
    %v237 = verf.f32.pop %v235
    %v238 = verf.f32.pop %v236
    %v239 = vadd.f32 %v237, 1.0
    %v240 = vadd.f32 %v238, 1.0
    %v241 = vmul.f32 %v233, %v239
    %v242 = vmul.f32 %v234, %v240
    %v243 = vld [vmem:[#allocation2] sm:$0xff]
    %v244 = vld [vmem:[#allocation2 + $0x8] sm:$0xff]
    %v245 = vpack.c.bf16 %v242, %v241
    %v246 = vld [vmem:[#allocation8] sm:$0xf]
    %v247 = vld [vmem:[#allocation8 + $0x4] sm:$0xf]
    %v248 = vld [vmem:[#allocation8 + $0x8] sm:$0xf]
    %v249 = vld [vmem:[#allocation8 + $0xc] sm:$0xf]
    %v250 = vld [vmem:[#allocation8 + $0x10] sm:$0xf]
    %v251 = vld [vmem:[#allocation8 + $0x14] sm:$0xf]
    %v252 = vld [vmem:[#allocation8 + $0x18] sm:$0xf]
    %v253 = vld [vmem:[#allocation8 + $0x1c] sm:$0xf]
    %v254 = vld [vmem:[#allocation8 + $0x20] sm:$0xf]
    %v255 = vld [vmem:[#allocation8 + $0x24] sm:$0xf]
    %v256 = vld [vmem:[#allocation8 + $0x28] sm:$0xf]
    %v257 = vld [vmem:[#allocation8 + $0x2c] sm:$0xf]
    %v258 = vld [vmem:[#allocation8 + $0x30] sm:$0xf]
    %v259 = vld [vmem:[#allocation8 + $0x34] sm:$0xf]
    %v260 = vld [vmem:[#allocation8 + $0x38] sm:$0xf]
    %v261 = vld [vmem:[#allocation8 + $0x3c] sm:$0xf]
    %v278 = vunpack.c.l.b16 %v246
    %v279 = vunpack.c.l.b16 %v247
    %v280 = vunpack.c.l.b16 %v248
    %v281 = vunpack.c.l.b16 %v249
    %v282 = vunpack.c.l.b16 %v250
    %v283 = vunpack.c.l.b16 %v251
    %v284 = vunpack.c.l.b16 %v252
    %v285 = vunpack.c.l.b16 %v253
    %v286 = vunpack.c.l.b16 %v254
    %v287 = vunpack.c.l.b16 %v255
    %v288 = vunpack.c.l.b16 %v256
    %v289 = vunpack.c.l.b16 %v257
    %v290 = vunpack.c.l.b16 %v258
    %v291 = vunpack.c.l.b16 %v259
    %v292 = vunpack.c.l.b16 %v260
    %v293 = vunpack.c.l.b16 %v261
    %v294 = vpack.c.b16 %v279, %v278
    %v295 = vpack.c.b16 %v281, %v280
    %v296 = vpack.c.b16 %v283, %v282
    %v297 = vpack.c.b16 %v285, %v284
    %v298 = vpack.c.b16 %v287, %v286
    %v299 = vpack.c.b16 %v289, %v288
    %v300 = vpack.c.b16 %v291, %v290
    %v301 = vpack.c.b16 %v293, %v292
    %310 = vmatprep.subr.bf16.mxu0 0
    %311 = vmatpush1.bf16.msra.mxu0 %v294
    %312 = vmatprep.subr.bf16.mxu0 0
    %313 = vmatpush1.bf16.msra.mxu0 %v295
    %314 = vmatprep.subr.bf16.mxu0 0
    %315 = vmatpush1.bf16.msra.mxu0 %v296
    %316 = vmatprep.subr.bf16.mxu0 0
    %317 = vmatpush1.bf16.msra.mxu0 %v297
    %318 = vmatprep.subr.bf16.mxu0 0
    %319 = vmatpush1.bf16.msra.mxu0 %v298
    %320 = vmatprep.subr.bf16.mxu0 0
    %321 = vmatpush1.bf16.msra.mxu0 %v299
    %322 = vmatprep.subr.bf16.mxu0 0
    %323 = vmatpush1.bf16.msra.mxu0 %v300
    %324 = vmatprep.subr.bf16.mxu0 0
    %325 = vmatpush1.bf16.msra.mxu0 %v301
    %326 = vmatprep.subr.bf16.mxu0 0
    %327 = vmatpush1.bf16.msra.mxu0 0
    %328 = vmatprep.subr.bf16.mxu0 0
    %329 = vmatpush1.bf16.msra.mxu0 0
    %330 = vmatprep.subr.bf16.mxu0 0
    %331 = vmatpush1.bf16.msra.mxu0 0
    %332 = vmatprep.subr.bf16.mxu0 0
    %333 = vmatpush1.bf16.msra.mxu0 0
    %334 = vmatprep.subr.bf16.mxu0 0
    %335 = vmatpush1.bf16.msra.mxu0 0
    %336 = vmatprep.subr.bf16.mxu0 0
    %337 = vmatpush1.bf16.msra.mxu0 0
    %338 = vmatprep.subr.bf16.mxu0 0
    %339 = vmatpush1.bf16.msra.mxu0 0
    %340 = vmatprep.subr.bf16.mxu0 0
    %341 = vmatpush1.bf16.msra.mxu0 0
    %342 = vmatprep.mubr.bf16.mxu0 0
    %343 = vmatmul.mubr.bf16.gmra.mrb[0].mxu0 %v245
    %v344 = vpop.f32.mrb[0].mxu0
    %v345 = vadd.f32 0.0, %v344
    %v346 = vpop.f32.mrb[0].mxu0
    %v347 = vpop.f32.mrb[0].mxu0
    %v348 = vadd.f32 0.0, %v347
    %v349 = vpop.f32.mrb[0].mxu0
    %350 = vdwg.mxu0
    %v351 = vadd.f32 %v243, %v345
    %v352 = vadd.f32 %v244, %v348
    %353 = vst [vmem:[#allocation2] sm:$0xff] %v351
    %354 = vst [vmem:[#allocation2 + $0x8] sm:$0xff] %v352
    %v355 = vld [vmem:[#allocation2] sm:$0xff]
    %v356 = vld [vmem:[#allocation2 + $0x8] sm:$0xff]
    %v357 = vld [vmem:[%s6] sm:$0x1]
    %v359 = vlaneseq
    %v360 = vshrl.u32 %v359, 7
    %v361 = vsub.s32 0, %v360
    %v362 = vrot.slane %v357, %v361
    %v364 = vadd.f32 %v355, %v362
    %v365 = vadd.f32 %v356, %v362
    %366 = vst [vmem:[#allocation9] sm:$0xff] %v364
    %367 = vst [vmem:[#allocation9 + $0x8] sm:$0xff] %v365
    // Predicated region
    $region42: #{tpu_custom_call.1} parent=1 // pred_check
      _
    $region43: #{tpu_custom_call.1} parent=1 // pred_check_branch
      %369 = sbr.rel (0) target = $region45
    $region44: #{tpu_custom_call.1} parent=1 // pred_region
      %s371 = ssub.s32 256, 256
      %372 = vsyncadd [#allocation5], %s371
      %s373 = sshll.u32 [#allocation9], 4
      %s374 = int_to_ptr.vmem [resolvable:$true] %s373
      %379 = dma.vmem_to_hbm [thread:$0]  %s374, 256, %s7, [#allocation5], 128, 128, 8
    $region45: #{tpu_custom_call.1} parent=1 // pred_fallthru
      _
    // Predicated region
    $region46: #{tpu_custom_call.1} parent=1 // pred_check
      _
    $region47: #{tpu_custom_call.1} parent=1 // pred_check_branch
      %381 = sbr.rel (0) target = $region49
    $region48: #{tpu_custom_call.1} parent=1 // pred_region
      %382 = dma.done [#allocation5], 256
    $region49: #{tpu_custom_call.1} parent=1 // pred_fallthru
      _
    %383 = vsyncpa [#allocation4], 1
    %384 = vsyncpa [#allocation7], 1
    %385 = vsyncpa [#allocation5], 1

</llo_original>
